<compile_context>
chip_gen: v7x
topology: tpu7x:2x2x1
jax: 0.10.0
libtpu: 0.0.40
codegen_flags: <defaults>
</compile_context>

<pallas_src>
import functools

import jax
import jax.numpy as jnp
import numpy as np
from jax.experimental import pallas as pl
from jax.experimental.pallas import tpu as pltpu


def _trigger_kernel(img_ref, trig_ref, corner_ref, sel_ref, out_ref):
    """out = (corner & sel) ? trig : img, all uint8, combined via broadcasts.

    img_ref    : (tile_pr, ps, W*C) uint8  image tile (tile_pr patch rows)
    trig_ref   : (1,       ps, W*C) uint8  trigger values, one patch-row period (resident)
    corner_ref : (1,       ps, W*C) uint8  1 inside the bottom-right corner (resident)
    sel_ref    : (tile_pr, 1,  W*C) uint8  per-patch selection, expanded along W*C
    out_ref    : (tile_pr, ps, W*C) uint8
    """
    img = img_ref[...]
    trig = jnp.broadcast_to(trig_ref[...], img.shape)      # leading-dim broadcast
    corner = jnp.broadcast_to(corner_ref[...], img.shape)  # leading-dim broadcast
    sel = jnp.broadcast_to(sel_ref[...], img.shape)        # sublane broadcast
    out_ref[...] = jnp.where((corner & sel) != 0, trig, img)


def _pick_tile_pr(n_pr, ps, wc):
    """Patch rows per grid step, sized against a conservative VMEM budget."""
    patch_row_bytes = ps * wc                 # unpadded uint8 bytes per patch row
    pad_mult = max(32 // ps, 1)               # worst-case uint8 sublane padding of the ps dim
    vmem_budget = 16 * 1024 * 1024            # below every generation's scoped-VMEM headroom
    # ~6 padded tile-equivalents live at once: img x2, out x2, sel x2 (sel pads ~1->32 rows).
    per_tile = vmem_budget // (6 * pad_mult * patch_row_bytes)
    tile_pr = max(1, min(n_pr, per_tile))
    if n_pr >= 2:                             # >=2 grid steps so both v7x TensorCores get work
        tile_pr = min(tile_pr, -(-n_pr // 2))
    return tile_pr


@functools.partial(jax.jit, static_argnums=(3, 4))
def colorful_patch_trigger(img_hwc_u8, trigger_pattern, patch_sel, patch_size, trigger_size):
    """Apply the patch-based trigger.

    img_hwc_u8      : (H, W, 3) uint8
    trigger_pattern : (trigger_size, trigger_size, 3) float32 (values 0. or 255.)
    patch_sel       : (H // patch_size, W // patch_size) bool
    returns         : (H, W, 3) uint8
    """
    H, W, C = img_hwc_u8.shape
    ps, ts = patch_size, trigger_size
    assert ts <= ps
    # TODO(synk): ragged border patches (PyTorch slicing clips them) not handled.
    assert H % ps == 0 and W % ps == 0
    off = ps - ts
    wc = W * C
    n_pr = H // ps

    # ---- tiny precompute (XLA, << N bytes) ---------------------------------
    pat_u8 = trigger_pattern.astype(jnp.uint8)                                  # (ts, ts, C)
    trig_tile = jnp.zeros((ps, ps, C), jnp.uint8).at[off:, off:, :].set(pat_u8)
    corner_tile = jnp.zeros((ps, ps, C), jnp.uint8).at[off:, off:, :].set(jnp.uint8(1))
    trig_row = jnp.tile(trig_tile, (1, W // ps, 1)).reshape(1, ps, wc)          # (1, ps, W*C)
    corner_row = jnp.tile(corner_tile, (1, W // ps, 1)).reshape(1, ps, wc)      # (1, ps, W*C)
    # Per-patch selection expanded along W*C only (patch-row resolution): N/ps bytes.
    sel = jnp.repeat(patch_sel.astype(jnp.uint8), ps * C, axis=1).reshape(n_pr, 1, wc)

    # ---- Pallas kernel -------------------------------------------------------
    img3 = img_hwc_u8.reshape(n_pr, ps, wc)   # free reshape of contiguous HWC
    tile_pr = _pick_tile_pr(n_pr, ps, wc)
    grid = (pl.cdiv(n_pr, tile_pr),)

    out3 = pl.pallas_call(
        _trigger_kernel,
        out_shape=jax.ShapeDtypeStruct((n_pr, ps, wc), jnp.uint8),
        grid=grid,
        in_specs=[
            pl.BlockSpec((tile_pr, ps, wc), lambda i: (i, 0, 0)),   # image tile
            pl.BlockSpec((1, ps, wc), lambda i: (0, 0, 0)),         # trigger period (resident)
            pl.BlockSpec((1, ps, wc), lambda i: (0, 0, 0)),         # corner mask  (resident)
            pl.BlockSpec((tile_pr, 1, wc), lambda i: (i, 0, 0)),    # per-patch selection
        ],
        out_specs=pl.BlockSpec((tile_pr, ps, wc), lambda i: (i, 0, 0)),
        compiler_params=pltpu.CompilerParams(
            dimension_semantics=("parallel",),
            vmem_limit_bytes=32 * 1024 * 1024,
        ),
    )(img3, trig_row, corner_row, sel)

    # TODO(synk): ceiling option -- alias the image (input_output_aliases) and DMA
    # only the bottom trigger_size rows of each patch row to reach ~2N*(ts/ps) traffic.
    return out3.reshape(H, W, C)


if __name__ == "__main__":
    patch_size = 8
    trigger_size = 3
    ratio = 0.6
    H, W, C = 32, 32, 3

    key = jax.random.PRNGKey(0)
    k_img, k_pat, k_sel = jax.random.split(key, 3)

    # Deterministic "image": uint8 values.
    img = jax.random.randint(k_img, (H, W, C), 0, 256, dtype=jnp.int32).astype(jnp.uint8)

    # Deterministic trigger pattern: random() thresholded at 0.5 -> {0, 255}.
    pat = jnp.where(jax.random.uniform(k_pat, (trigger_size, trigger_size, C)) < 0.5,
                    0.0, 255.0).astype(jnp.float32)

    # Per-patch inclusion (models random.random() < ratio per patch).
    patch_sel = jax.random.uniform(k_sel, (H // patch_size, W // patch_size)) < ratio

    out = colorful_patch_trigger(img, pat, patch_sel, patch_size, trigger_size)
    out = jax.block_until_ready(out)

    # Pure-numpy reference check (same semantics as the PyTorch forward).
    ref = np.array(img).copy()
    pat_np = np.array(pat)
    sel_np = np.array(patch_sel)
    for i in range(0, H, patch_size):
        for j in range(0, W, patch_size):
            if sel_np[i // patch_size, j // patch_size]:
                ref[i + patch_size - trigger_size:i + patch_size,
                    j + patch_size - trigger_size:j + patch_size, :] = pat_np
    ref = np.clip(ref, 0, 255).astype(np.uint8)

    np.testing.assert_array_equal(np.array(out), ref)
    print("KERNEL_OK")
</pallas_src>

<mosaic_0001>
module attributes {stable_mosaic.version = 11 : i64} {
  func.func @_trigger_kernel(%arg0: i32, %arg1: memref<2x8x96xi8, #tpu.memory_space<vmem>>, %arg2: memref<1x8x96xi8, #tpu.memory_space<vmem>>, %arg3: memref<1x8x96xi8, #tpu.memory_space<vmem>>, %arg4: memref<2x1x96xi8, #tpu.memory_space<vmem>>, %arg5: memref<2x8x96xi8, #tpu.memory_space<vmem>>) attributes {dimension_semantics = [#tpu.dimension_semantics<parallel>], iteration_bounds = array<i64: 2>, scalar_prefetch = 0 : i64, scratch_operands = 0 : i64, tpu.core_type = #tpu.core_type<tc>, window_params = [{transform_indices = @transform_0, window_bounds = array<i64: 2, 8, 96>}, {pipeline_mode = #tpu.pipeline_mode<synchronous>, transform_indices = @transform_1, window_bounds = array<i64: 1, 8, 96>}, {pipeline_mode = #tpu.pipeline_mode<synchronous>, transform_indices = @transform_2, window_bounds = array<i64: 1, 8, 96>}, {transform_indices = @transform_3, window_bounds = array<i64: 2, 1, 96>}, {transform_indices = @transform_4, window_bounds = array<i64: 2, 8, 96>}]} {
    %c0 = arith.constant 0 : index
    %c0_0 = arith.constant 0 : index
    %c0_1 = arith.constant 0 : index
    %0 = vector.load %arg1[%c0, %c0_0, %c0_1] : memref<2x8x96xi8, #tpu.memory_space<vmem>>, vector<2x8x96xi8>
    %c0_2 = arith.constant 0 : index
    %c0_3 = arith.constant 0 : index
    %c0_4 = arith.constant 0 : index
    %1 = vector.load %arg2[%c0_2, %c0_3, %c0_4] : memref<1x8x96xi8, #tpu.memory_space<vmem>>, vector<1x8x96xi8>
    %2 = vector.shape_cast %1 : vector<1x8x96xi8> to vector<1x8x96xi8>
    %3 = vector.broadcast %2 : vector<1x8x96xi8> to vector<2x8x96xi8>
    %c0_5 = arith.constant 0 : index
    %c0_6 = arith.constant 0 : index
    %c0_7 = arith.constant 0 : index
    %4 = vector.load %arg3[%c0_5, %c0_6, %c0_7] : memref<1x8x96xi8, #tpu.memory_space<vmem>>, vector<1x8x96xi8>
    %5 = vector.shape_cast %4 : vector<1x8x96xi8> to vector<1x8x96xi8>
    %6 = vector.broadcast %5 : vector<1x8x96xi8> to vector<2x8x96xi8>
    %c0_8 = arith.constant 0 : index
    %c0_9 = arith.constant 0 : index
    %c0_10 = arith.constant 0 : index
    %7 = vector.load %arg4[%c0_8, %c0_9, %c0_10] : memref<2x1x96xi8, #tpu.memory_space<vmem>>, vector<2x1x96xi8>
    %8 = vector.shape_cast %7 : vector<2x1x96xi8> to vector<2x1x96xi8>
    %9 = vector.broadcast %8 : vector<2x1x96xi8> to vector<2x8x96xi8>
    %10 = arith.andi %6, %9 : vector<2x8x96xi8>
    %c0_i8 = arith.constant 0 : i8
    %11 = vector.broadcast %c0_i8 : i8 to vector<2x8x96xi8>
    %12 = arith.cmpi ne, %10, %11 : vector<2x8x96xi8>
    %13 = arith.select %12, %3, %0 : vector<2x8x96xi1>, vector<2x8x96xi8>
    %c0_11 = arith.constant 0 : index
    %c0_12 = arith.constant 0 : index
    %c0_13 = arith.constant 0 : index
    %14 = vector.load %arg5[%c0_11, %c0_12, %c0_13] : memref<2x8x96xi8, #tpu.memory_space<vmem>>, vector<2x8x96xi8>
    tpu.vector_store %arg5[%c0_11, %c0_12, %c0_13], %13 {strides = array<i32>} : memref<2x8x96xi8, #tpu.memory_space<vmem>>, vector<2x8x96xi8>,
    return
  }
  func.func @transform_0(%arg0: i32) -> (i32, i32, i32) {
    %c0_i32 = arith.constant 0 : i32
    %c0_i32_0 = arith.constant 0 : i32
    %c0_i32_1 = arith.constant 0 : i32
    return %arg0, %c0_i32, %c0_i32_0 : i32, i32, i32
  }
  func.func @transform_1(%arg0: i32) -> (i32, i32, i32) {
    %c0_i32 = arith.constant 0 : i32
    %c0_i32_0 = arith.constant 0 : i32
    %c0_i32_1 = arith.constant 0 : i32
    %c0_i32_2 = arith.constant 0 : i32
    return %c0_i32, %c0_i32_0, %c0_i32_1 : i32, i32, i32
  }
  func.func @transform_2(%arg0: i32) -> (i32, i32, i32) {
    %c0_i32 = arith.constant 0 : i32
    %c0_i32_0 = arith.constant 0 : i32
    %c0_i32_1 = arith.constant 0 : i32
    %c0_i32_2 = arith.constant 0 : i32
    return %c0_i32, %c0_i32_0, %c0_i32_1 : i32, i32, i32
  }
  func.func @transform_3(%arg0: i32) -> (i32, i32, i32) {
    %c0_i32 = arith.constant 0 : i32
    %c0_i32_0 = arith.constant 0 : i32
    %c0_i32_1 = arith.constant 0 : i32
    return %arg0, %c0_i32, %c0_i32_0 : i32, i32, i32
  }
  func.func @transform_4(%arg0: i32) -> (i32, i32, i32) {
    %c0_i32 = arith.constant 0 : i32
    %c0_i32_0 = arith.constant 0 : i32
    %c0_i32_1 = arith.constant 0 : i32
    return %arg0, %c0_i32, %c0_i32_0 : i32, i32, i32
  }
}

</mosaic_0001>

<llo_original>
// kernel: colorful_patch_trigger.1
$region0: #{colorful_patch_trigger.1}
  #allocation0 [shape = 'u32[]', space=smem, size = 0x4, offset = 0x4, fixed_abs, tag = 'smem constant byte address 0x4 - core index']
  #allocation1 [shape = 'u32[144,128]{1,0:T(1,128)}', space=vmem, size = 0x12000, scoped, tag = 'internal scratch']
  %s0 = inlined_call_operand.vmem [shape: u8[4,8,96], index: 0, kind: input, shape index: {}]
  %s1 = inlined_call_operand.vmem [shape: u8[1,8,96], index: 1, kind: input, shape index: {}]
  %s2 = inlined_call_operand.vmem [shape: u8[1,8,96], index: 2, kind: input, shape index: {}]
  %s3 = inlined_call_operand.vmem [shape: u8[4,1,96], index: 3, kind: input, shape index: {}]
  %s4 = inlined_call_operand.vmem [shape: u8[4,8,96], index: 4, kind: output, shape index: {}]
  %s5 = sld [smem:[#allocation0]]
  $region49: #{colorful_patch_trigger.1} parent=0
    _
  %s7 = ssub.s32 1, %s5
  %s8 = scalar_select 0, %s7, %s5
  loop: start=0, step=1, limit=4
  $region2: #{colorful_patch_trigger.1} parent=0 // loop_pre_header
    _
  $region3: #{colorful_patch_trigger.1} parent=0 // loop_header
    %s10 = sphi 0, %s14
    %p11 = scmp.ge.s32.totalorder %s10, 4
    %s20 = sphi 0, %s22
    %s23 = sphi 0, %s20
    %s24 = sphi 0, %s23
    %s40 = sphi 0, %s24
    %s44 = sphi 0, %s44
    %s46 = sphi 0, %s44
    %s47 = sphi 0, %s46
    %s61 = sphi 0, %s47
    %s65 = sphi 0, %s65
    %s67 = sphi 0, %s65
    %s68 = sphi 0, %s67
    %s82 = sphi 0, %s68
    %s88 = sphi 0, %s90
    %s91 = sphi 0, %s88
    %s92 = sphi 0, %s91
    %s108 = sphi 0, %s92
    %s114 = sphi 0, %s116
    %s117 = sphi 0, %s114
    %s118 = sphi 0, %s117
    %s134 = sphi 0, %s118
  $region4: #{colorful_patch_trigger.1} parent=0 // loop_header_branch
    %13 = sbr.rel (%p11) target = $region8
  $region5: #{colorful_patch_trigger.1} parent=0 // loop_body
    %s15 = ssub.s32 %s10, 1
    %s16 = ssub.s32 %s10, 2
    %s17 = sadd.s32 %s10, 1
    %s18 = ssub.s32 %s10, %s17
    %p19 = scmp.eq.s32.totalorder %s18, 0
    %s21 = sadd.s32 %s20, 1
    %s22 = scalar_select %p19, %s20, %s21
    %p25 = pneg %p19
    %p26 = scmp.eq.s32.totalorder %s10, 1
    %p27 = por %p25, %p26
    %p28 = scmp.ne.s32.totalorder %s20, %s23
    %p29 = scmp.eq.s32.totalorder %s10, 0
    %p30 = por %p28, %p29
    %p31 = scmp.ne.s32.totalorder %s20, %s23
    %p32 = scmp.eq.s32.totalorder %s15, 1
    %p33 = por %p31, %p32
    %p34 = scmp.ne.s32.totalorder %s23, %s24
    %p35 = scmp.eq.s32.totalorder %s15, 0
    %p36 = por %p34, %p35
    %p37 = scmp.ne.s32.totalorder %s23, %s24
    %p38 = scmp.eq.s32.totalorder %s16, 1
    %p39 = por %p37, %p38
    %p41 = scmp.ne.s32.totalorder %s24, %s40
    %p42 = scmp.eq.s32.totalorder %s16, 0
    %p43 = por %p41, %p42
    %s45 = sadd.s32 %s44, 1
    %p48 = scmp.eq.s32.totalorder %s10, 1
    %p49 = scmp.ne.s32.totalorder %s44, %s46
    %p50 = scmp.eq.s32.totalorder %s10, 0
    %p51 = por %p49, %p50
    %p52 = scmp.ne.s32.totalorder %s44, %s46
    %p53 = scmp.eq.s32.totalorder %s15, 1
    %p54 = por %p52, %p53
    %p55 = scmp.ne.s32.totalorder %s46, %s47
    %p56 = scmp.eq.s32.totalorder %s15, 0
    %p57 = por %p55, %p56
    %p58 = scmp.ne.s32.totalorder %s46, %s47
    %p59 = scmp.eq.s32.totalorder %s16, 1
    %p60 = por %p58, %p59
    %p62 = scmp.ne.s32.totalorder %s47, %s61
    %p63 = scmp.eq.s32.totalorder %s16, 0
    %p64 = por %p62, %p63
    %s66 = sadd.s32 %s65, 1
    %p69 = scmp.eq.s32.totalorder %s10, 1
    %p70 = scmp.ne.s32.totalorder %s65, %s67
    %p71 = scmp.eq.s32.totalorder %s10, 0
    %p72 = por %p70, %p71
    %p73 = scmp.ne.s32.totalorder %s65, %s67
    %p74 = scmp.eq.s32.totalorder %s15, 1
    %p75 = por %p73, %p74
    %p76 = scmp.ne.s32.totalorder %s67, %s68
    %p77 = scmp.eq.s32.totalorder %s15, 0
    %p78 = por %p76, %p77
    %p79 = scmp.ne.s32.totalorder %s67, %s68
    %p80 = scmp.eq.s32.totalorder %s16, 1
    %p81 = por %p79, %p80
    %p83 = scmp.ne.s32.totalorder %s68, %s82
    %p84 = scmp.eq.s32.totalorder %s16, 0
    %p85 = por %p83, %p84
    %s86 = ssub.s32 %s10, %s17
    %p87 = scmp.eq.s32.totalorder %s86, 0
    %s89 = sadd.s32 %s88, 1
    %s90 = scalar_select %p87, %s88, %s89
    %p93 = pneg %p87
    %p94 = scmp.eq.s32.totalorder %s10, 1
    %p95 = por %p93, %p94
    %p96 = scmp.ne.s32.totalorder %s88, %s91
    %p97 = scmp.eq.s32.totalorder %s10, 0
    %p98 = por %p96, %p97
    %p99 = scmp.ne.s32.totalorder %s88, %s91
    %p100 = scmp.eq.s32.totalorder %s15, 1
    %p101 = por %p99, %p100
    %p102 = scmp.ne.s32.totalorder %s91, %s92
    %p103 = scmp.eq.s32.totalorder %s15, 0
    %p104 = por %p102, %p103
    %p105 = scmp.ne.s32.totalorder %s91, %s92
    %p106 = scmp.eq.s32.totalorder %s16, 1
    %p107 = por %p105, %p106
    %p109 = scmp.ne.s32.totalorder %s92, %s108
    %p110 = scmp.eq.s32.totalorder %s16, 0
    %p111 = por %p109, %p110
    %s112 = ssub.s32 %s10, %s17
    %p113 = scmp.eq.s32.totalorder %s112, 0
    %s115 = sadd.s32 %s114, 1
    %s116 = scalar_select %p113, %s114, %s115
    %p119 = pneg %p113
    %p120 = scmp.eq.s32.totalorder %s10, 1
    %p121 = por %p119, %p120
    %p122 = scmp.ne.s32.totalorder %s114, %s117
    %p123 = scmp.eq.s32.totalorder %s10, 0
    %p124 = por %p122, %p123
    %p125 = scmp.ne.s32.totalorder %s114, %s117
    %p126 = scmp.eq.s32.totalorder %s15, 1
    %p127 = por %p125, %p126
    %p128 = scmp.ne.s32.totalorder %s117, %s118
    %p129 = scmp.eq.s32.totalorder %s15, 0
    %p130 = por %p128, %p129
    %p131 = scmp.ne.s32.totalorder %s117, %s118
    %p132 = scmp.eq.s32.totalorder %s16, 1
    %p133 = por %p131, %p132
    %p135 = scmp.ne.s32.totalorder %s118, %s134
    %p136 = scmp.eq.s32.totalorder %s16, 0
    %p137 = por %p135, %p136
    %p138 = scmp.le.s32.totalorder 1, %s10
    %p139 = scmp.lt.s32.totalorder %s10, 3
    %p140 = pnand %p138, %p139
    %p141 = pneg %p140
    // Predicated region
    $region9: #{colorful_patch_trigger.1} parent=5 // pred_check
      _
    $region10: #{colorful_patch_trigger.1} parent=5 // pred_check_branch
      %143 = sbr.rel (%p140) target = $region12
    $region11: #{colorful_patch_trigger.1} parent=5 // pred_region
      %s144 = ssub.s32 %s10, 1
      // Predicated region
      $region13: #{colorful_patch_trigger.1} parent=11 // pred_check
        %p145 = pneg %p57
      $region14: #{colorful_patch_trigger.1} parent=11 // pred_check_branch
        %147 = sbr.rel (%p145) target = $region16
      $region15: #{colorful_patch_trigger.1} parent=11 // pred_region
        _
      $region16: #{colorful_patch_trigger.1} parent=11 // pred_fallthru
        _
      // Predicated region
      $region17: #{colorful_patch_trigger.1} parent=11 // pred_check
        %p148 = pneg %p78
      $region18: #{colorful_patch_trigger.1} parent=11 // pred_check_branch
        %150 = sbr.rel (%p148) target = $region20
      $region19: #{colorful_patch_trigger.1} parent=11 // pred_region
        _
      $region20: #{colorful_patch_trigger.1} parent=11 // pred_fallthru
        _
    $region12: #{colorful_patch_trigger.1} parent=5 // pred_fallthru
      _
    %p151 = scmp.lt.s32.totalorder %s10, 2
    // Predicated region
    $region21: #{colorful_patch_trigger.1} parent=5 // pred_check
      %p152 = pneg %p151
    $region22: #{colorful_patch_trigger.1} parent=5 // pred_check_branch
      %154 = sbr.rel (%p152) target = $region24
    $region23: #{colorful_patch_trigger.1} parent=5 // pred_region
      // Predicated region
      $region25: #{colorful_patch_trigger.1} parent=23 // pred_check
        %p155 = pneg %p30
      $region26: #{colorful_patch_trigger.1} parent=23 // pred_check_branch
        %157 = sbr.rel (%p155) target = $region28
      $region27: #{colorful_patch_trigger.1} parent=23 // pred_region
        %s158 = smul.u32 2, %s10
        %p159 = scmp.lt.s32.totalorder %s158, 3
        %s160 = scalar_select %p159, %s158, 3
        %s161 = smul.addr %s160, 2
        %s162 = scalar_lea.vmem %s0, %s161
        %s163 = smul.u32 2, %s10
      $region28: #{colorful_patch_trigger.1} parent=23 // pred_fallthru
        _
      // Predicated region
      $region29: #{colorful_patch_trigger.1} parent=23 // pred_check
        %p164 = pneg %p98
      $region30: #{colorful_patch_trigger.1} parent=23 // pred_check_branch
        %166 = sbr.rel (%p164) target = $region32
      $region31: #{colorful_patch_trigger.1} parent=23 // pred_region
        %s167 = smul.u32 2, %s10
        %p168 = scmp.lt.s32.totalorder %s167, 3
        %s169 = scalar_select %p168, %s167, 3
        %s170 = scalar_lea.vmem %s3, %s169
        %s171 = smul.u32 2, %s10
      $region32: #{colorful_patch_trigger.1} parent=23 // pred_fallthru
        _
    $region24: #{colorful_patch_trigger.1} parent=5 // pred_fallthru
      _
    %p172 = scmp.le.s32.totalorder 1, %s10
    %p173 = scmp.lt.s32.totalorder %s10, 3
    %p174 = pnand %p172, %p173
    %p175 = pneg %p174
    // Predicated region
    $region33: #{colorful_patch_trigger.1} parent=5 // pred_check
      _
    $region34: #{colorful_patch_trigger.1} parent=5 // pred_check_branch
      %177 = sbr.rel (%p174) target = $region36
    $region35: #{colorful_patch_trigger.1} parent=5 // pred_region
      %s178 = ssub.s32 %s10, 1
      %s179 = smul.u32 2, %s15
      %p180 = scmp.lt.s32.totalorder %s179, 3
      %s181 = scalar_select %p180, %s179, 3
      %s182 = smul.addr %s181, 2
      %s183 = scalar_lea.vmem %s0, %s182
      %p184 = pneg %p36
      %p185 = pneg %p33
      %p186 = pneg %p57
      %p187 = pneg %p54
      %p188 = pneg %p78
      %p189 = pneg %p75
      %s190 = smul.u32 2, %s15
      %p191 = scmp.lt.s32.totalorder %s190, 3
      %s192 = scalar_select %p191, %s190, 3
      %s193 = scalar_lea.vmem %s3, %s192
      %p194 = pneg %p104
      %p195 = pneg %p101
      %p196 = pneg %p130
      %p197 = pneg %p127
      %s198 = smul.u32 2, %s15
      %p199 = scmp.lt.s32.totalorder %s198, 3
      %s200 = scalar_select %p199, %s198, 3
      %s201 = smul.addr %s200, 2
      %s202 = scalar_lea.vmem %s4, %s201
      %s203 = smul.u32 2, %s15
      %p204 = scmp.lt.s32.totalorder %s203, 3
      %s205 = scalar_select %p204, %s203, 3
      %s206 = smul.addr %s205, 2
      %s207 = scalar_lea.vmem %s0, %s206
      %s208 = smul.u32 2, %s15
      %s209 = smul.u32 2, %s15
      %p210 = scmp.lt.s32.totalorder %s209, 3
      %s211 = scalar_select %p210, %s209, 3
      %s212 = scalar_lea.vmem %s3, %s211
      %s213 = smul.u32 2, %s15
      %s214 = smul.u32 2, %s15
      %p215 = scmp.lt.s32.totalorder %s214, 3
      %s216 = scalar_select %p215, %s214, 3
      %s217 = smul.addr %s216, 2
      %s218 = scalar_lea.vmem %s4, %s217
      %s219 = smul.u32 2, %s15
      %v220 = vld [vmem:[%s207] sm:$0x3]
      %v221 = vld [vmem:[%s207 + $0x2] sm:$0x3]
      %v222 = vld [vmem:[%s1] sm:$0x3]
      %v223 = vld [vmem:[%s2] sm:$0x3]
      %v224 = vld [vmem:[%s212] sm:$0x1]
      %v225 = vld [vmem:[%s212 + $0x1] sm:$0x1]
      %v227 = vpack.i.b16 %v224, %v224
      %v228 = vpack.i.b8 %v227, %v227
      %v229 = vlaneseq
      %v230 = vshrl.u32 %v229, 7
      %v231 = vsub.s32 0, %v230
      %v232 = vrot.slane %v228, %v231
      %v234 = vpack.i.b16 %v225, %v225
      %v235 = vpack.i.b8 %v234, %v234
      %v236 = vlaneseq
      %v237 = vshrl.u32 %v236, 7
      %v238 = vsub.s32 0, %v237
      %v239 = vrot.slane %v235, %v238
      %v240 = vand.u32 %v223, %v232
      %v241 = vand.u32 %v223, %v239
      %vm242 = vnez %v240
      %vm243 = vnez %v241
      %v244 = vsel %vm242, %v222, %v220
      %v245 = vsel %vm243, %v222, %v221
      %vm246 = vcmask 779264
      %247 = vst.msk [vmem:[%s218] sm:$0x3] %vm246, %v244
      %248 = vst.msk [vmem:[%s218 + $0x2] sm:$0x3] %vm246, %v245
      %s249 = smul.u32 2, %s15
      %p250 = scmp.lt.s32.totalorder %s249, 3
      %s251 = scalar_select %p250, %s249, 3
      %s252 = smul.addr %s251, 2
      %s253 = scalar_lea.vmem %s4, %s252
      // Predicated region
      $region37: #{colorful_patch_trigger.1} parent=35 // pred_check
        %p254 = pneg %p127
      $region38: #{colorful_patch_trigger.1} parent=35 // pred_check_branch
        %256 = sbr.rel (%p254) target = $region40
      $region39: #{colorful_patch_trigger.1} parent=35 // pred_region
        %s257 = smul.u32 2, %s15
      $region40: #{colorful_patch_trigger.1} parent=35 // pred_fallthru
        _
    $region36: #{colorful_patch_trigger.1} parent=5 // pred_fallthru
      _
    %p258 = scmp.le.s32.totalorder 2, %s10
    // Predicated region
    $region41: #{colorful_patch_trigger.1} parent=5 // pred_check
      %p259 = pneg %p258
    $region42: #{colorful_patch_trigger.1} parent=5 // pred_check_branch
      %261 = sbr.rel (%p259) target = $region44
    $region43: #{colorful_patch_trigger.1} parent=5 // pred_region
      %s262 = ssub.s32 %s10, 2
      // Predicated region
      $region45: #{colorful_patch_trigger.1} parent=43 // pred_check
        %p263 = pneg %p133
      $region46: #{colorful_patch_trigger.1} parent=43 // pred_check_branch
        %265 = sbr.rel (%p263) target = $region48
      $region47: #{colorful_patch_trigger.1} parent=43 // pred_region
        %s266 = smul.u32 2, %s16
        %p267 = scmp.lt.s32.totalorder %s266, 3
        %s268 = scalar_select %p267, %s266, 3
        %s269 = smul.addr %s268, 2
        %s270 = scalar_lea.vmem %s4, %s269
      $region48: #{colorful_patch_trigger.1} parent=43 // pred_fallthru
        _
    $region44: #{colorful_patch_trigger.1} parent=5 // pred_fallthru
      _
  $region6: #{colorful_patch_trigger.1} parent=0 // loop_footer
    %s14 = sadd.s32 1, %s10
  $region7: #{colorful_patch_trigger.1} parent=0 // loop_footer_branch
    %9 = sbr.rel target = $region3
  $region8: #{colorful_patch_trigger.1} parent=0 // loop_exit
    _

</llo_original>
